<compile_context>
chip_gen: v5e
topology: v5e:2x2
jax: 0.10.0
libtpu: 0.0.40
codegen_flags: <defaults>
</compile_context>

<pallas_src>
import jax
import jax.numpy as jnp
from jax.experimental import pallas as pl
from jax.experimental.pallas import tpu as pltpu


LANE = 128
SUBLANE = 8


def _round_up(x, m):
    return (x + m - 1) // m * m


def _block_diag(mats):
    rows = sum(m.shape[0] for m in mats)
    cols = sum(m.shape[1] for m in mats)
    out = jnp.zeros((rows, cols), mats[0].dtype)
    r = c = 0
    for m in mats:
        out = out.at[r:r + m.shape[0], c:c + m.shape[1]].set(m)
        r += m.shape[0]
        c += m.shape[1]
    return out


# --------------------------------------------------------------------------
# Kernel
# --------------------------------------------------------------------------
def _make_fused_head_kernel(num_hidden, compute_dtype):
    """refs = x, (w_hidden, shift) * num_hidden, w_out, b_out, out.

    All blocks are (channels, tL): channels on sublanes, L on lanes, so every
    store is lane-dense along L and no transpose is needed anywhere.
    """

    def kernel(*refs):
        x_ref = refs[0]
        o_ref = refs[-1]

        # x arrives in f32 straight from HBM; cast on the VPU (free slots).
        h = x_ref[...].astype(compute_dtype)            # (C_in, tL)
        for i in range(num_hidden):
            w = refs[1 + 2 * i][...]                    # (Hd_out, Hd_in), BN scale folded
            shift = refs[2 + 2 * i][...]                # (Hd_out, 1) f32 folded BN shift
            acc = jnp.dot(w, h, preferred_element_type=jnp.float32)   # MXU
            acc = jnp.maximum(acc + shift, 0.0)         # f32 epilogue (VPU)
            h = acc.astype(compute_dtype)
        w_out = refs[1 + 2 * num_hidden][...]           # (n_pad, Hd_tot)
        b_out = refs[2 + 2 * num_hidden][...]           # (n_pad, 1) f32
        out = jnp.dot(w_out, h, preferred_element_type=jnp.float32)
        o_ref[...] = (out + b_out).astype(o_ref.dtype)  # lane-dense (n_pad, tL)

    return kernel


# --------------------------------------------------------------------------
# Parameter fusion (host side, done once)
# --------------------------------------------------------------------------
def fuse_head_params(params, head_order, compute_dtype=jnp.bfloat16):
    """Fuse all heads into one weight stack.

    - BN scale folded into hidden weights (w' = scale[:,None] * w); only the
      additive shift is applied in the kernel (in f32).
    - Hidden layer 0 weights concatenated along the OUTPUT axis (shared x);
      deeper hidden layers and the final projection are block-diagonal so the
      heads stay mathematically independent.
    - The final projection/bias are zero-padded only to the SUBLANE granule
      (multiple of 8 rows), not 128 lanes.
    Returns (flat_inputs, num_hidden, n_pad, head_slices).
    """
    num_hidden = len(params[head_order[0]]["hidden"])
    for h in head_order:
        assert len(params[h]["hidden"]) == num_hidden, "heads must share num_conv"

    flat = []
    for layer in range(num_hidden):
        ws, shifts = [], []
        for h in head_order:
            w, scale, shift = params[h]["hidden"][layer]   # w: (c_out, c_in)
            ws.append(w * scale[:, None])                  # fold BN scale
            shifts.append(shift)
        if layer == 0:
            w_f = jnp.concatenate(ws, axis=0)              # shared input x
        else:
            w_f = _block_diag(ws)                          # per-head independence
        shift_f = jnp.concatenate(shifts, axis=0).reshape(-1, 1)
        flat += [w_f.astype(compute_dtype), shift_f.astype(jnp.float32)]

    w_out_f = _block_diag([params[h]["w_out"] for h in head_order])   # (n_cls, Hd_tot)
    b_out_f = jnp.concatenate([params[h]["b_out"] for h in head_order], axis=0)
    n_classes = w_out_f.shape[0]
    n_pad = _round_up(n_classes, SUBLANE)                  # 10 -> 16, NOT 128
    w_out_f = jnp.pad(w_out_f, ((0, n_pad - n_classes), (0, 0)))
    b_out_f = jnp.pad(b_out_f, (0, n_pad - n_classes)).reshape(-1, 1)
    flat += [w_out_f.astype(compute_dtype), b_out_f.astype(jnp.float32)]

    head_slices, off = {}, 0
    for h in head_order:
        c = params[h]["w_out"].shape[0]
        head_slices[h] = (off, c)
        off += c
    return flat, num_hidden, n_pad, head_slices


def _choose_tl(B, L):
    """Largest lane tile (multiple of 128, up to 2048) such that the total
    grid step count B * ceil(L/tL) is even (even split across v7x's 2 TCs).
    Falls back to the largest tile that fits if no even split exists."""
    L128 = _round_up(L, LANE)
    for tl in (2048, 1024, 512, 256, 128):
        if tl > L128:
            continue
        n_l = -(-L128 // tl)
        total = B * n_l
        if total >= 2 and total % 2 == 0:
            return tl
    return min(L128, 2048)


# --------------------------------------------------------------------------
# Forward wrapper
# --------------------------------------------------------------------------
def ffn_forward(x_ncl, params, *, tl=None, compute_dtype=jnp.bfloat16):
    """Fused forward: x_ncl [B, C_in, L] -> dict head -> [B, classes, L].

    All heads run in ONE pallas_call. The input is consumed in its native NCL
    layout (channels on sublanes, L on lanes) and the output is produced in
    NCL as well, so there are no wrapper transposes at all.
    """
    B, C_in, L = x_ncl.shape
    head_order = list(params.keys())
    flat, num_hidden, n_pad, head_slices = fuse_head_params(
        params, head_order, compute_dtype)

    if tl is None:
        tl = _choose_tl(B, L)
    L_pad = _round_up(L, tl)
    if L_pad != L:
        x_ncl = jnp.pad(x_ncl, ((0, 0), (0, 0), (0, L_pad - L)))

    grid = (B, L_pad // tl)
    in_specs = [pl.BlockSpec((None, C_in, tl), lambda b, j: (b, 0, j))]
    for arr in flat:
        # Grid-invariant weights/shifts/bias: constant (0,0) index_map, Mosaic
        # skips re-DMA across steps.
        in_specs.append(pl.BlockSpec(arr.shape, lambda b, j: (0, 0)))
    out_spec = pl.BlockSpec((None, n_pad, tl), lambda b, j: (b, 0, j))

    out = pl.pallas_call(
        _make_fused_head_kernel(num_hidden, compute_dtype),
        out_shape=jax.ShapeDtypeStruct((B, n_pad, L_pad), jnp.float32),
        grid_spec=pltpu.PrefetchScalarGridSpec(
            num_scalar_prefetch=0,
            grid=grid,
            in_specs=in_specs,
            out_specs=out_spec,
        ),
        compiler_params=pltpu.CompilerParams(
            dimension_semantics=("parallel", "parallel")),
    )(x_ncl, *flat)

    # Drop padded L columns immediately (padded x columns become ReLU(shift)
    # after layer 0, so never reduce over the padded slab before this slice).
    out = out[:, :, :L]
    ret = {}
    for h in head_order:
        off, c = head_slices[h]
        ret[h] = out[:, off:off + c, :]
    return ret


# --------------------------------------------------------------------------
# Synthetic parameters + references
# --------------------------------------------------------------------------
def init_ffn_params(key, heads, in_channels, head_conv, init_bias=-2.19):
    """Deterministic synthetic parameters matching the head-stack shapes.
    BN1d (inference mode) is represented as per-channel (scale, shift).
    Weights use the PyTorch (out_channels, in_channels) convention."""
    eps = 1e-5
    params = {}
    for head, (classes, num_conv) in heads.items():
        hidden = []
        c_prev = in_channels
        for _ in range(num_conv - 1):
            key, kw, kg, kb, km, kv = jax.random.split(key, 6)
            w = jax.random.normal(kw, (head_conv, c_prev), jnp.float32) * 0.1
            gamma = 1.0 + 0.1 * jax.random.normal(kg, (head_conv,), jnp.float32)
            beta = 0.1 * jax.random.normal(kb, (head_conv,), jnp.float32)
            mean = 0.1 * jax.random.normal(km, (head_conv,), jnp.float32)
            var = jax.random.uniform(kv, (head_conv,), jnp.float32, 0.5, 1.5)
            scale = gamma / jnp.sqrt(var + eps)
            shift = beta - mean * scale
            hidden.append((w, scale, shift))
            c_prev = head_conv
        key, kw, kb = jax.random.split(key, 3)
        w_out = jax.random.normal(kw, (classes, head_conv), jnp.float32) * 0.1
        if head == "heatmap":
            b_out = jnp.full((classes,), init_bias, jnp.float32)
        else:
            b_out = 0.1 * jax.random.normal(kb, (classes,), jnp.float32)
        params[head] = dict(hidden=hidden, w_out=w_out, b_out=b_out)
    return params


def ffn_reference(x_ncl, params, compute_dtype=None):
    """Pure-JAX reference (NCL convention, like PyTorch Conv1d k=1).

    If `compute_dtype` is given, operands are quantized to that dtype (with BN
    scale folded into the weight, exactly as the kernel does) so the comparison
    isolates kernel correctness from low-precision rounding."""
    def q(a):
        return a.astype(compute_dtype).astype(jnp.float32) if compute_dtype else a

    ret = {}
    for head, p in params.items():
        y = x_ncl
        for (w, scale, shift) in p["hidden"]:
            if compute_dtype is not None:
                y = jnp.einsum("oc,bcl->bol", q(w * scale[:, None]), q(y),
                               preferred_element_type=jnp.float32)
                y = y + shift.reshape(1, -1, 1)
            else:
                y = jnp.einsum("oc,bcl->bol", w, y)
                y = y * scale.reshape(1, -1, 1) + shift.reshape(1, -1, 1)
            y = jnp.maximum(y, 0.0)
        out = jnp.einsum("oc,bcl->bol", q(p["w_out"]), q(y),
                         preferred_element_type=jnp.float32)
        out = out + p["b_out"].reshape(1, -1, 1)
        ret[head] = out
    return ret


if __name__ == "__main__":
    key = jax.random.PRNGKey(0)

    # Small shapes: Conv1d-style input [B, C_in, L].
    B, C_IN, L = 2, 32, 128
    HEAD_CONV = 32
    # head -> (classes, num_conv); num_conv=2 => one ConvModule + out layer.
    HEADS = {
        "reg": (2, 2),
        "height": (1, 2),
        "dim": (3, 2),
        "heatmap": (4, 2),
    }

    kx, kp = jax.random.split(key)
    x = jax.random.normal(kx, (B, C_IN, L), jnp.float32)
    params = init_ffn_params(kp, HEADS, C_IN, HEAD_CONV)

    out = ffn_forward(x, params, compute_dtype=jnp.bfloat16)
    out = jax.tree_util.tree_map(jax.block_until_ready, out)

    # 1) Tight check vs. a bf16-operand-matched reference (isolates kernel
    #    correctness from quantization).
    ref_q = ffn_reference(x, params, compute_dtype=jnp.bfloat16)
    # 2) Loose check vs. the exact f32 PyTorch-semantics reference.
    #    NOTE: intermediate activations are re-quantized to bf16 between
    #    layers (deviates from f32 training checkpoints).
    ref_f32 = ffn_reference(x, params)

    for head in HEADS:
        assert out[head].shape == (B, HEADS[head][0], L), head
        err_q = float(jnp.max(jnp.abs(out[head] - ref_q[head])))
        assert err_q < 2e-3, ("matched-ref mismatch", head, err_q)
        ref_max = float(jnp.max(jnp.abs(ref_f32[head])))
        err_f = float(jnp.max(jnp.abs(out[head] - ref_f32[head])))
        assert err_f < 1e-2 + 2e-2 * ref_max, ("f32-ref mismatch", head, err_f)

    print("KERNEL_OK")
</pallas_src>

<mosaic_0001>
module attributes {stable_mosaic.version = 11 : i64} {
  func.func @kernel(%arg0: i32, %arg1: i32, %arg2: memref<1x32x128xf32, #tpu.memory_space<vmem>>, %arg3: memref<128x32xbf16, #tpu.memory_space<vmem>>, %arg4: memref<128x1xf32, #tpu.memory_space<vmem>>, %arg5: memref<16x128xbf16, #tpu.memory_space<vmem>>, %arg6: memref<16x1xf32, #tpu.memory_space<vmem>>, %arg7: memref<1x16x128xf32, #tpu.memory_space<vmem>>) attributes {dimension_semantics = [#tpu.dimension_semantics<parallel>, #tpu.dimension_semantics<parallel>], iteration_bounds = array<i64: 2, 1>, scalar_prefetch = 0 : i64, scratch_operands = 0 : i64, tpu.core_type = #tpu.core_type<tc>, window_params = [{transform_indices = @transform_0, window_bounds = array<i64: 1, 32, 128>}, {pipeline_mode = #tpu.pipeline_mode<synchronous>, transform_indices = @transform_1, window_bounds = array<i64: 128, 32>}, {pipeline_mode = #tpu.pipeline_mode<synchronous>, transform_indices = @transform_2, window_bounds = array<i64: 128, 1>}, {pipeline_mode = #tpu.pipeline_mode<synchronous>, transform_indices = @transform_3, window_bounds = array<i64: 16, 128>}, {pipeline_mode = #tpu.pipeline_mode<synchronous>, transform_indices = @transform_4, window_bounds = array<i64: 16, 1>}, {transform_indices = @transform_5, window_bounds = array<i64: 1, 16, 128>}]} {
    %c0 = arith.constant 0 : index
    %c0_0 = arith.constant 0 : index
    %c0_1 = arith.constant 0 : index
    %0 = vector.load %arg2[%c0, %c0_0, %c0_1] : memref<1x32x128xf32, #tpu.memory_space<vmem>>, vector<1x32x128xf32>
    %1 = vector.shape_cast %0 : vector<1x32x128xf32> to vector<32x128xf32>
    %2 = arith.truncf %1 : vector<32x128xf32> to vector<32x128xbf16>
    %c0_2 = arith.constant 0 : index
    %c0_3 = arith.constant 0 : index
    %3 = vector.load %arg3[%c0_2, %c0_3] : memref<128x32xbf16, #tpu.memory_space<vmem>>, vector<128x32xbf16>
    %c0_4 = arith.constant 0 : index
    %c0_5 = arith.constant 0 : index
    %4 = vector.load %arg4[%c0_4, %c0_5] : memref<128x1xf32, #tpu.memory_space<vmem>>, vector<128x1xf32>
    %cst = arith.constant dense<0.000000e+00> : vector<128x128xf32>
    %5 = tpu.matmul %3, %2, %cst {dimension_numbers = #tpu.dot_dimension_numbers<[1], [0], [0], [1], [0, 0, 1, 1], [], []>} : vector<128x32xbf16>, vector<32x128xbf16>, vector<128x128xf32> -> vector<128x128xf32>
    %6 = vector.broadcast %4 : vector<128x1xf32> to vector<128x128xf32>
    %7 = arith.addf %5, %6 : vector<128x128xf32>
    %cst_6 = arith.constant 0.000000e+00 : f32
    %8 = vector.broadcast %cst_6 : f32 to vector<128x128xf32>
    %9 = arith.maximumf %7, %8 : vector<128x128xf32>
    %10 = arith.truncf %9 : vector<128x128xf32> to vector<128x128xbf16>
    %c0_7 = arith.constant 0 : index
    %c0_8 = arith.constant 0 : index
    %11 = vector.load %arg5[%c0_7, %c0_8] : memref<16x128xbf16, #tpu.memory_space<vmem>>, vector<16x128xbf16>
    %c0_9 = arith.constant 0 : index
    %c0_10 = arith.constant 0 : index
    %12 = vector.load %arg6[%c0_9, %c0_10] : memref<16x1xf32, #tpu.memory_space<vmem>>, vector<16x1xf32>
    %cst_11 = arith.constant dense<0.000000e+00> : vector<16x128xf32>
    %13 = tpu.matmul %11, %10, %cst_11 {dimension_numbers = #tpu.dot_dimension_numbers<[1], [0], [0], [1], [0, 0, 1, 1], [], []>} : vector<16x128xbf16>, vector<128x128xbf16>, vector<16x128xf32> -> vector<16x128xf32>
    %14 = vector.broadcast %12 : vector<16x1xf32> to vector<16x128xf32>
    %15 = arith.addf %13, %14 : vector<16x128xf32>
    %c0_12 = arith.constant 0 : index
    %c0_13 = arith.constant 0 : index
    %c0_14 = arith.constant 0 : index
    %16 = vector.load %arg7[%c0_12, %c0_13, %c0_14] : memref<1x16x128xf32, #tpu.memory_space<vmem>>, vector<1x16x128xf32>
    %17 = vector.shape_cast %16 : vector<1x16x128xf32> to vector<16x128xf32>
    %18 = vector.shape_cast %15 : vector<16x128xf32> to vector<1x16x128xf32>
    tpu.vector_store %arg7[%c0_12, %c0_13, %c0_14], %18 {strides = array<i32>} : memref<1x16x128xf32, #tpu.memory_space<vmem>>, vector<1x16x128xf32>,
    return
  }
  func.func @transform_0(%arg0: i32, %arg1: i32) -> (i32, i32, i32) {
    %c0_i32 = arith.constant 0 : i32
    %c0_i32_0 = arith.constant 0 : i32
    return %arg0, %c0_i32, %arg1 : i32, i32, i32
  }
  func.func @transform_1(%arg0: i32, %arg1: i32) -> (i32, i32) {
    %c0_i32 = arith.constant 0 : i32
    %c0_i32_0 = arith.constant 0 : i32
    %c0_i32_1 = arith.constant 0 : i32
    return %c0_i32, %c0_i32_0 : i32, i32
  }
  func.func @transform_2(%arg0: i32, %arg1: i32) -> (i32, i32) {
    %c0_i32 = arith.constant 0 : i32
    %c0_i32_0 = arith.constant 0 : i32
    %c0_i32_1 = arith.constant 0 : i32
    return %c0_i32, %c0_i32_0 : i32, i32
  }
  func.func @transform_3(%arg0: i32, %arg1: i32) -> (i32, i32) {
    %c0_i32 = arith.constant 0 : i32
    %c0_i32_0 = arith.constant 0 : i32
    %c0_i32_1 = arith.constant 0 : i32
    return %c0_i32, %c0_i32_0 : i32, i32
  }
  func.func @transform_4(%arg0: i32, %arg1: i32) -> (i32, i32) {
    %c0_i32 = arith.constant 0 : i32
    %c0_i32_0 = arith.constant 0 : i32
    %c0_i32_1 = arith.constant 0 : i32
    return %c0_i32, %c0_i32_0 : i32, i32
  }
  func.func @transform_5(%arg0: i32, %arg1: i32) -> (i32, i32, i32) {
    %c0_i32 = arith.constant 0 : i32
    %c0_i32_0 = arith.constant 0 : i32
    return %arg0, %c0_i32, %arg1 : i32, i32, i32
  }
}

</mosaic_0001>

<llo_original>
// kernel: tpu_custom_call.1
$region0: #{tpu_custom_call.1}
  #allocation0 [shape = 'u32[]', space=smem, size = 0x4, offset = 0x4, fixed_abs, tag = 'smem constant byte address 0x4 - core index']
  #allocation1 [shape = 'u32[72,128]{1,0:T(1,128)}', space=vmem, size = 0x9000, scoped, tag = 'internal scratch']
  %s0 = inlined_call_operand.vmem [shape: f32[2,32,128], index: 0, kind: input, shape index: {}]
  %s1 = inlined_call_operand.vmem [shape: bf16[128,32], index: 1, kind: input, shape index: {}]
  %s2 = inlined_call_operand.vmem [shape: f32[128,1], index: 2, kind: input, shape index: {}]
  %s3 = inlined_call_operand.vmem [shape: bf16[16,128], index: 3, kind: input, shape index: {}]
  %s4 = inlined_call_operand.vmem [shape: f32[16,1], index: 4, kind: input, shape index: {}]
  %s5 = inlined_call_operand.hbm [shape: f32[2,16,128], index: 5, kind: output, shape index: {}]
  %s6 = sld [smem:[#allocation0]]
  $region53: #{tpu_custom_call.1} parent=0
    _
  %s8 = ssub.s32 1, %s6
  %s9 = scalar_select 0, %s8, %s6
  $region1: #{tpu_custom_call.1} parent=0
    #allocation2 [shape = 'u8[16384]{0}', space=vmem, size = 0x4000, scoped, tag = 'output window, operand 0']
    #allocation3 [shape = 's32[2]{0}', space=sflag, size = 0x8, scoped, tag = 'scoped memory for tpu_custom_call.1']
    %10 = vsyncpa [#allocation3], 0
    %s11 = scalar_lea.sflag [#allocation3], 1
    %12 = vsyncpa %s11, 0
    loop: start=0, step=1, limit=4
    $region2: #{tpu_custom_call.1} parent=1 // loop_pre_header
      _
    $region3: #{tpu_custom_call.1} parent=1 // loop_header
      %s14 = sphi 0, %s18
      %p15 = scmp.ge.s32.totalorder %s14, 4
      %s21 = sphi 0, %s33
      %s22 = sphi 0, %s29
      %s23 = sphi 0, %s21
      %s24 = sphi 0, %s22
      %s25 = sphi 0, %s23
      %s26 = sphi 0, %s24
      %s38 = sphi 0, %s40
      %s41 = sphi 0, %s38
      %s42 = sphi 0, %s41
      %s58 = sphi 0, %s42
      %s62 = sphi 0, %s62
      %s64 = sphi 0, %s62
      %s65 = sphi 0, %s64
      %s79 = sphi 0, %s65
      %s83 = sphi 0, %s83
      %s85 = sphi 0, %s83
      %s86 = sphi 0, %s85
      %s100 = sphi 0, %s86
      %s104 = sphi 0, %s104
      %s106 = sphi 0, %s104
      %s107 = sphi 0, %s106
      %s121 = sphi 0, %s107
      %s125 = sphi 0, %s125
      %s127 = sphi 0, %s125
      %s128 = sphi 0, %s127
      %s142 = sphi 0, %s128
      %s150 = sphi 0, %s152
      %s153 = sphi 0, %s150
      %s154 = sphi 0, %s153
      %s170 = sphi 0, %s154
    $region4: #{tpu_custom_call.1} parent=1 // loop_header_branch
      %17 = sbr.rel (%p15) target = $region8
    $region5: #{tpu_custom_call.1} parent=1 // loop_body
      %s19 = ssub.s32 %s14, 1
      %s20 = ssub.s32 %s14, 2
      %s27 = sadd.s32 1, %s22
      %p28 = scmp.ge.s32.totalorder %s27, 1
      %s29 = scalar_select %p28, 0, %s27
      %s30 = sadd.s32 1, %s21
      %s31 = scalar_select %p28, %s30, %s21
      %p32 = scmp.ge.s32.totalorder %s31, 2
      %s33 = scalar_select %p32, 0, %s31
      %s34 = ssub.s32 %s21, %s33
      %s35 = ssub.s32 %s22, %s29
      %s36 = sor.u32 %s34, %s35
      %p37 = scmp.eq.s32.totalorder %s36, 0
      %s39 = sadd.s32 %s38, 1
      %s40 = scalar_select %p37, %s38, %s39
      %p43 = pneg %p37
      %p44 = scmp.eq.s32.totalorder %s14, 1
      %p45 = por %p43, %p44
      %p46 = scmp.ne.s32.totalorder %s38, %s41
      %p47 = scmp.eq.s32.totalorder %s14, 0
      %p48 = por %p46, %p47
      %p49 = scmp.ne.s32.totalorder %s38, %s41
      %p50 = scmp.eq.s32.totalorder %s19, 1
      %p51 = por %p49, %p50
      %p52 = scmp.ne.s32.totalorder %s41, %s42
      %p53 = scmp.eq.s32.totalorder %s19, 0
      %p54 = por %p52, %p53
      %p55 = scmp.ne.s32.totalorder %s41, %s42
      %p56 = scmp.eq.s32.totalorder %s20, 1
      %p57 = por %p55, %p56
      %p59 = scmp.ne.s32.totalorder %s42, %s58
      %p60 = scmp.eq.s32.totalorder %s20, 0
      %p61 = por %p59, %p60
      %s63 = sadd.s32 %s62, 1
      %p66 = scmp.eq.s32.totalorder %s14, 1
      %p67 = scmp.ne.s32.totalorder %s62, %s64
      %p68 = scmp.eq.s32.totalorder %s14, 0
      %p69 = por %p67, %p68
      %p70 = scmp.ne.s32.totalorder %s62, %s64
      %p71 = scmp.eq.s32.totalorder %s19, 1
      %p72 = por %p70, %p71
      %p73 = scmp.ne.s32.totalorder %s64, %s65
      %p74 = scmp.eq.s32.totalorder %s19, 0
      %p75 = por %p73, %p74
      %p76 = scmp.ne.s32.totalorder %s64, %s65
      %p77 = scmp.eq.s32.totalorder %s20, 1
      %p78 = por %p76, %p77
      %p80 = scmp.ne.s32.totalorder %s65, %s79
      %p81 = scmp.eq.s32.totalorder %s20, 0
      %p82 = por %p80, %p81
      %s84 = sadd.s32 %s83, 1
      %p87 = scmp.eq.s32.totalorder %s14, 1
      %p88 = scmp.ne.s32.totalorder %s83, %s85
      %p89 = scmp.eq.s32.totalorder %s14, 0
      %p90 = por %p88, %p89
      %p91 = scmp.ne.s32.totalorder %s83, %s85
      %p92 = scmp.eq.s32.totalorder %s19, 1
      %p93 = por %p91, %p92
      %p94 = scmp.ne.s32.totalorder %s85, %s86
      %p95 = scmp.eq.s32.totalorder %s19, 0
      %p96 = por %p94, %p95
      %p97 = scmp.ne.s32.totalorder %s85, %s86
      %p98 = scmp.eq.s32.totalorder %s20, 1
      %p99 = por %p97, %p98
      %p101 = scmp.ne.s32.totalorder %s86, %s100
      %p102 = scmp.eq.s32.totalorder %s20, 0
      %p103 = por %p101, %p102
      %s105 = sadd.s32 %s104, 1
      %p108 = scmp.eq.s32.totalorder %s14, 1
      %p109 = scmp.ne.s32.totalorder %s104, %s106
      %p110 = scmp.eq.s32.totalorder %s14, 0
      %p111 = por %p109, %p110
      %p112 = scmp.ne.s32.totalorder %s104, %s106
      %p113 = scmp.eq.s32.totalorder %s19, 1
      %p114 = por %p112, %p113
      %p115 = scmp.ne.s32.totalorder %s106, %s107
      %p116 = scmp.eq.s32.totalorder %s19, 0
      %p117 = por %p115, %p116
      %p118 = scmp.ne.s32.totalorder %s106, %s107
      %p119 = scmp.eq.s32.totalorder %s20, 1
      %p120 = por %p118, %p119
      %p122 = scmp.ne.s32.totalorder %s107, %s121
      %p123 = scmp.eq.s32.totalorder %s20, 0
      %p124 = por %p122, %p123
      %s126 = sadd.s32 %s125, 1
      %p129 = scmp.eq.s32.totalorder %s14, 1
      %p130 = scmp.ne.s32.totalorder %s125, %s127
      %p131 = scmp.eq.s32.totalorder %s14, 0
      %p132 = por %p130, %p131
      %p133 = scmp.ne.s32.totalorder %s125, %s127
      %p134 = scmp.eq.s32.totalorder %s19, 1
      %p135 = por %p133, %p134
      %p136 = scmp.ne.s32.totalorder %s127, %s128
      %p137 = scmp.eq.s32.totalorder %s19, 0
      %p138 = por %p136, %p137
      %p139 = scmp.ne.s32.totalorder %s127, %s128
      %p140 = scmp.eq.s32.totalorder %s20, 1
      %p141 = por %p139, %p140
      %p143 = scmp.ne.s32.totalorder %s128, %s142
      %p144 = scmp.eq.s32.totalorder %s20, 0
      %p145 = por %p143, %p144
      %s146 = ssub.s32 %s21, %s33
      %s147 = ssub.s32 %s22, %s29
      %s148 = sor.u32 %s146, %s147
      %p149 = scmp.eq.s32.totalorder %s148, 0
      %s151 = sadd.s32 %s150, 1
      %s152 = scalar_select %p149, %s150, %s151
      %p155 = pneg %p149
      %p156 = scmp.eq.s32.totalorder %s14, 1
      %p157 = por %p155, %p156
      %p158 = scmp.ne.s32.totalorder %s150, %s153
      %p159 = scmp.eq.s32.totalorder %s14, 0
      %p160 = por %p158, %p159
      %p161 = scmp.ne.s32.totalorder %s150, %s153
      %p162 = scmp.eq.s32.totalorder %s19, 1
      %p163 = por %p161, %p162
      %p164 = scmp.ne.s32.totalorder %s153, %s154
      %p165 = scmp.eq.s32.totalorder %s19, 0
      %p166 = por %p164, %p165
      %p167 = scmp.ne.s32.totalorder %s153, %s154
      %p168 = scmp.eq.s32.totalorder %s20, 1
      %p169 = por %p167, %p168
      %p171 = scmp.ne.s32.totalorder %s154, %s170
      %p172 = scmp.eq.s32.totalorder %s20, 0
      %p173 = por %p171, %p172
      %p174 = scmp.le.s32.totalorder 1, %s14
      %p175 = scmp.lt.s32.totalorder %s14, 3
      %p176 = pnand %p174, %p175
      %p177 = pneg %p176
      // Predicated region
      $region9: #{tpu_custom_call.1} parent=5 // pred_check
        _
      $region10: #{tpu_custom_call.1} parent=5 // pred_check_branch
        %179 = sbr.rel (%p176) target = $region12
      $region11: #{tpu_custom_call.1} parent=5 // pred_region
        %s180 = ssub.s32 %s14, 1
        // Predicated region
        $region13: #{tpu_custom_call.1} parent=11 // pred_check
          %p181 = pneg %p75
        $region14: #{tpu_custom_call.1} parent=11 // pred_check_branch
          %183 = sbr.rel (%p181) target = $region16
        $region15: #{tpu_custom_call.1} parent=11 // pred_region
          _
        $region16: #{tpu_custom_call.1} parent=11 // pred_fallthru
          _
        // Predicated region
        $region17: #{tpu_custom_call.1} parent=11 // pred_check
          %p184 = pneg %p96
        $region18: #{tpu_custom_call.1} parent=11 // pred_check_branch
          %186 = sbr.rel (%p184) target = $region20
        $region19: #{tpu_custom_call.1} parent=11 // pred_region
          _
        $region20: #{tpu_custom_call.1} parent=11 // pred_fallthru
          _
        // Predicated region
        $region21: #{tpu_custom_call.1} parent=11 // pred_check
          %p187 = pneg %p117
        $region22: #{tpu_custom_call.1} parent=11 // pred_check_branch
          %189 = sbr.rel (%p187) target = $region24
        $region23: #{tpu_custom_call.1} parent=11 // pred_region
          _
        $region24: #{tpu_custom_call.1} parent=11 // pred_fallthru
          _
        // Predicated region
        $region25: #{tpu_custom_call.1} parent=11 // pred_check
          %p190 = pneg %p138
        $region26: #{tpu_custom_call.1} parent=11 // pred_check_branch
          %192 = sbr.rel (%p190) target = $region28
        $region27: #{tpu_custom_call.1} parent=11 // pred_region
          _
        $region28: #{tpu_custom_call.1} parent=11 // pred_fallthru
          _
      $region12: #{tpu_custom_call.1} parent=5 // pred_fallthru
        _
      %p193 = scmp.lt.s32.totalorder %s14, 2
      // Predicated region
      $region29: #{tpu_custom_call.1} parent=5 // pred_check
        %p194 = pneg %p193
      $region30: #{tpu_custom_call.1} parent=5 // pred_check_branch
        %196 = sbr.rel (%p194) target = $region32
      $region31: #{tpu_custom_call.1} parent=5 // pred_region
        // Predicated region
        $region33: #{tpu_custom_call.1} parent=31 // pred_check
          %p197 = pneg %p48
        $region34: #{tpu_custom_call.1} parent=31 // pred_check_branch
          %199 = sbr.rel (%p197) target = $region36
        $region35: #{tpu_custom_call.1} parent=31 // pred_region
          %p200 = scmp.lt.s32.totalorder %s21, 1
          %s201 = scalar_select %p200, %s21, 1
          %p202 = scmp.lt.s32.totalorder %s22, 0
          %s203 = scalar_select %p202, %s22, 0
          %s204 = smul.addr %s201, 4
          %s205 = sadd.s32 %s203, %s204
          %s206 = smul.addr %s205, 8
          %s207 = scalar_lea.vmem %s0, %s206
        $region36: #{tpu_custom_call.1} parent=31 // pred_fallthru
          _
      $region32: #{tpu_custom_call.1} parent=5 // pred_fallthru
        _
      %p208 = scmp.le.s32.totalorder 1, %s14
      %p209 = scmp.lt.s32.totalorder %s14, 3
      %p210 = pnand %p208, %p209
      %p211 = pneg %p210
      // Predicated region
      $region37: #{tpu_custom_call.1} parent=5 // pred_check
        _
      $region38: #{tpu_custom_call.1} parent=5 // pred_check_branch
        %213 = sbr.rel (%p210) target = $region40
      $region39: #{tpu_custom_call.1} parent=5 // pred_region
        %s214 = ssub.s32 %s14, 1
        %p215 = scmp.lt.s32.totalorder %s23, 1
        %s216 = scalar_select %p215, %s23, 1
        %p217 = scmp.lt.s32.totalorder %s24, 0
        %s218 = scalar_select %p217, %s24, 0
        %s219 = smul.addr %s216, 4
        %s220 = sadd.s32 %s218, %s219
        %s221 = smul.addr %s220, 8
        %s222 = scalar_lea.vmem %s0, %s221
        %p223 = pneg %p54
        %p224 = pneg %p51
        %p225 = pneg %p75
        %p226 = pneg %p72
        %p227 = pneg %p96
        %p228 = pneg %p93
        %p229 = pneg %p117
        %p230 = pneg %p114
        %p231 = pneg %p138
        %p232 = pneg %p135
        %p233 = pneg %p166
        %p234 = pneg %p163
        %s235 = sand.u32 %s153, 1
        %s236 = scalar_lea.sflag [#allocation3], %s235
        %s237 = sand.u32 %s153, 1
        %s238 = smul.addr %s237, 16
        %s239 = scalar_lea.vmem [#allocation2], %s238
        %p240 = scmp.lt.s32.totalorder %s23, 1
        %s241 = scalar_select %p240, %s23, 1
        %p242 = scmp.lt.s32.totalorder %s24, 0
        %s243 = scalar_select %p242, %s24, 0
        %s244 = smul.addr %s241, 4
        %s245 = sadd.s32 %s243, %s244
        %s246 = smul.addr %s245, 8
        %s247 = scalar_lea.vmem %s0, %s246
        %v249 = vld [vmem:[%s247] sm:$0xff]
        %v250 = vld [vmem:[%s247 + $0x8] sm:$0xff]
        %v251 = vld [vmem:[%s247 + $0x10] sm:$0xff]
        %v252 = vld [vmem:[%s247 + $0x18] sm:$0xff]
        %v253 = vpack.c.bf16 %v250, %v249
        %v254 = vpack.c.bf16 %v252, %v251
        %v255 = vld [vmem:[%s1] sm:$0xf]
        %v256 = vld [vmem:[%s1 + $0x4] sm:$0xf]
        %v257 = vld [vmem:[%s1 + $0x8] sm:$0xf]
        %v258 = vld [vmem:[%s1 + $0xc] sm:$0xf]
        %v259 = vld [vmem:[%s1 + $0x10] sm:$0xf]
        %v260 = vld [vmem:[%s1 + $0x14] sm:$0xf]
        %v261 = vld [vmem:[%s1 + $0x18] sm:$0xf]
        %v262 = vld [vmem:[%s1 + $0x1c] sm:$0xf]
        %v263 = vld [vmem:[%s1 + $0x20] sm:$0xf]
        %v264 = vld [vmem:[%s1 + $0x24] sm:$0xf]
        %v265 = vld [vmem:[%s1 + $0x28] sm:$0xf]
        %v266 = vld [vmem:[%s1 + $0x2c] sm:$0xf]
        %v267 = vld [vmem:[%s1 + $0x30] sm:$0xf]
        %v268 = vld [vmem:[%s1 + $0x34] sm:$0xf]
        %v269 = vld [vmem:[%s1 + $0x38] sm:$0xf]
        %v270 = vld [vmem:[%s1 + $0x3c] sm:$0xf]
        %v271 = vld [vmem:[%s2] sm:$0xff]
        %v272 = vld [vmem:[%s2 + $0x8] sm:$0xff]
        %v273 = vld [vmem:[%s2 + $0x10] sm:$0xff]
        %v274 = vld [vmem:[%s2 + $0x18] sm:$0xff]
        %v275 = vld [vmem:[%s2 + $0x20] sm:$0xff]
        %v276 = vld [vmem:[%s2 + $0x28] sm:$0xff]
        %v277 = vld [vmem:[%s2 + $0x30] sm:$0xff]
        %v278 = vld [vmem:[%s2 + $0x38] sm:$0xff]
        %v279 = vld [vmem:[%s2 + $0x40] sm:$0xff]
        %v280 = vld [vmem:[%s2 + $0x48] sm:$0xff]
        %v281 = vld [vmem:[%s2 + $0x50] sm:$0xff]
        %v282 = vld [vmem:[%s2 + $0x58] sm:$0xff]
        %v283 = vld [vmem:[%s2 + $0x60] sm:$0xff]
        %v284 = vld [vmem:[%s2 + $0x68] sm:$0xff]
        %v285 = vld [vmem:[%s2 + $0x70] sm:$0xff]
        %v286 = vld [vmem:[%s2 + $0x78] sm:$0xff]
        %288 = vset.pattern.permute.xlu0 0
        %289 = vperm.xlu0 %288, %v271
        %v290 = vpop.permute.xlu0 %289
        %293 = vset.pattern.permute.xlu0 0
        %294 = vperm.xlu0 %293, %v272
        %v295 = vpop.permute.xlu0 %294
        %298 = vset.pattern.permute.xlu0 0
        %299 = vperm.xlu0 %298, %v273
        %v300 = vpop.permute.xlu0 %299
        %303 = vset.pattern.permute.xlu0 0
        %304 = vperm.xlu0 %303, %v274
        %v305 = vpop.permute.xlu0 %304
        %308 = vset.pattern.permute.xlu0 0
        %309 = vperm.xlu0 %308, %v275
        %v310 = vpop.permute.xlu0 %309
        %313 = vset.pattern.permute.xlu0 0
        %314 = vperm.xlu0 %313, %v276
        %v315 = vpop.permute.xlu0 %314
        %318 = vset.pattern.permute.xlu0 0
        %319 = vperm.xlu0 %318, %v277
        %v320 = vpop.permute.xlu0 %319
        %323 = vset.pattern.permute.xlu0 0
        %324 = vperm.xlu0 %323, %v278
        %v325 = vpop.permute.xlu0 %324
        %328 = vset.pattern.permute.xlu0 0
        %329 = vperm.xlu0 %328, %v279
        %v330 = vpop.permute.xlu0 %329
        %333 = vset.pattern.permute.xlu0 0
        %334 = vperm.xlu0 %333, %v280
        %v335 = vpop.permute.xlu0 %334
        %338 = vset.pattern.permute.xlu0 0
        %339 = vperm.xlu0 %338, %v281
        %v340 = vpop.permute.xlu0 %339
        %343 = vset.pattern.permute.xlu0 0
        %344 = vperm.xlu0 %343, %v282
        %v345 = vpop.permute.xlu0 %344
        %348 = vset.pattern.permute.xlu0 0
        %349 = vperm.xlu0 %348, %v283
        %v350 = vpop.permute.xlu0 %349
        %353 = vset.pattern.permute.xlu0 0
        %354 = vperm.xlu0 %353, %v284
        %v355 = vpop.permute.xlu0 %354
        %358 = vset.pattern.permute.xlu0 0
        %359 = vperm.xlu0 %358, %v285
        %v360 = vpop.permute.xlu0 %359
        %363 = vset.pattern.permute.xlu0 0
        %364 = vperm.xlu0 %363, %v286
        %v365 = vpop.permute.xlu0 %364
        %v383 = vunpack.c.l.b16 %v255
        %v384 = vunpack.c.l.b16 %v256
        %v385 = vunpack.c.l.b16 %v257
        %v386 = vunpack.c.l.b16 %v258
        %v387 = vunpack.c.l.b16 %v259
        %v388 = vunpack.c.l.b16 %v260
        %v389 = vunpack.c.l.b16 %v261
        %v390 = vunpack.c.l.b16 %v262
        %v391 = vunpack.c.l.b16 %v263
        %v392 = vunpack.c.l.b16 %v264
        %v393 = vunpack.c.l.b16 %v265
        %v394 = vunpack.c.l.b16 %v266
        %v395 = vunpack.c.l.b16 %v267
        %v396 = vunpack.c.l.b16 %v268
        %v397 = vunpack.c.l.b16 %v269
        %v398 = vunpack.c.l.b16 %v270
        %v399 = vpack.c.b16 %v384, %v383
        %v400 = vpack.c.b16 %v386, %v385
        %v401 = vpack.c.b16 %v388, %v387
        %v402 = vpack.c.b16 %v390, %v389
        %v403 = vpack.c.b16 %v392, %v391
        %v404 = vpack.c.b16 %v394, %v393
        %v405 = vpack.c.b16 %v396, %v395
        %v406 = vpack.c.b16 %v398, %v397
        %vm407 = vcmask 261120
        %v409 = vsel %vm407, %v399, 0
        %v412 = vsel %vm407, %v400, 0
        %v415 = vsel %vm407, %v401, 0
        %v418 = vsel %vm407, %v402, 0
        %v421 = vsel %vm407, %v403, 0
        %v424 = vsel %vm407, %v404, 0
        %v427 = vsel %vm407, %v405, 0
        %v430 = vsel %vm407, %v406, 0
        %432 = vmatpush.bf16.msra.mxu0 0
        %433 = vmatpush.bf16.msra.mxu0 0
        %434 = vmatpush.bf16.msra.mxu0 0
        %435 = vmatpush.bf16.msra.mxu0 0
        %436 = vmatpush.bf16.msra.mxu0 0
        %437 = vmatpush.bf16.msra.mxu0 0
        %438 = vmatpush.bf16.msra.mxu0 %v254
        %439 = vmatpush.bf16.msra.mxu0 %v253
        %440 = vmatmul.bf16.gmra.mxu0 %v409
        %v441 = vpop.f32.mrf.mxu0
        %v442 = vadd.f32 %v290, %v441
        %v443 = vpop.f32.mrf.mxu0
        %v444 = vadd.f32 %v295, %v443
        %445 = vmatmul.bf16.gmra.mxu0 %v412
        %v446 = vpop.f32.mrf.mxu0
        %v447 = vadd.f32 %v300, %v446
        %v448 = vpop.f32.mrf.mxu0
        %v449 = vadd.f32 %v305, %v448
        %450 = vmatmul.bf16.gmra.mxu0 %v415
        %v451 = vpop.f32.mrf.mxu0
        %v452 = vadd.f32 %v310, %v451
        %v453 = vpop.f32.mrf.mxu0
        %v454 = vadd.f32 %v315, %v453
        %455 = vmatmul.bf16.gmra.mxu0 %v418
        %v456 = vpop.f32.mrf.mxu0
        %v457 = vadd.f32 %v320, %v456
        %v458 = vpop.f32.mrf.mxu0
        %v459 = vadd.f32 %v325, %v458
        %460 = vmatmul.bf16.gmra.mxu0 %v421
        %v461 = vpop.f32.mrf.mxu0
        %v462 = vadd.f32 %v330, %v461
        %v463 = vpop.f32.mrf.mxu0
        %v464 = vadd.f32 %v335, %v463
        %465 = vmatmul.bf16.gmra.mxu0 %v424
        %v466 = vpop.f32.mrf.mxu0
        %v467 = vadd.f32 %v340, %v466
        %v468 = vpop.f32.mrf.mxu0
        %v469 = vadd.f32 %v345, %v468
        %470 = vmatmul.bf16.gmra.mxu0 %v427
        %v471 = vpop.f32.mrf.mxu0
        %v472 = vadd.f32 %v350, %v471
        %v473 = vpop.f32.mrf.mxu0
        %v474 = vadd.f32 %v355, %v473
        %475 = vmatmul.bf16.gmra.mxu0 %v430
        %v476 = vpop.f32.mrf.mxu0
        %v477 = vadd.f32 %v360, %v476
        %v478 = vpop.f32.mrf.mxu0
        %v479 = vadd.f32 %v365, %v478
        %480 = vdwg.mxu0
        %v481 = vmax.f32 %v442, 0.0
        %v482 = vmax.f32 %v444, 0.0
        %v483 = vmax.f32 %v447, 0.0
        %v484 = vmax.f32 %v449, 0.0
        %v485 = vmax.f32 %v452, 0.0
        %v486 = vmax.f32 %v454, 0.0
        %v487 = vmax.f32 %v457, 0.0
        %v488 = vmax.f32 %v459, 0.0
        %v489 = vmax.f32 %v462, 0.0
        %v490 = vmax.f32 %v464, 0.0
        %v491 = vmax.f32 %v467, 0.0
        %v492 = vmax.f32 %v469, 0.0
        %v493 = vmax.f32 %v472, 0.0
        %v494 = vmax.f32 %v474, 0.0
        %v495 = vmax.f32 %v477, 0.0
        %v496 = vmax.f32 %v479, 0.0
        %v497 = vpack.c.bf16 %v482, %v481
        %v498 = vpack.c.bf16 %v484, %v483
        %v499 = vpack.c.bf16 %v486, %v485
        %v500 = vpack.c.bf16 %v488, %v487
        %v501 = vpack.c.bf16 %v490, %v489
        %v502 = vpack.c.bf16 %v492, %v491
        %v503 = vpack.c.bf16 %v494, %v493
        %v504 = vpack.c.bf16 %v496, %v495
        %v505 = vld [vmem:[%s3] sm:$0xf]
        %v506 = vld [vmem:[%s3 + $0x4] sm:$0xf]
        %v507 = vld [vmem:[%s4] sm:$0xff]
        %v508 = vld [vmem:[%s4 + $0x8] sm:$0xff]
        %510 = vset.pattern.permute.xlu0 0
        %511 = vperm.xlu0 %510, %v507
        %v512 = vpop.permute.xlu0 %511
        %515 = vset.pattern.permute.xlu0 0
        %516 = vperm.xlu0 %515, %v508
        %v517 = vpop.permute.xlu0 %516
        %v521 = vunpack.c.l.b16 %v505
        %v522 = vunpack.c.l.b16 %v506
        %v523 = vpack.c.b16 %v522, %v521
        %525 = vmatpush.bf16.msra.mxu0 %v504
        %526 = vmatpush.bf16.msra.mxu0 %v503
        %527 = vmatpush.bf16.msra.mxu0 %v502
        %528 = vmatpush.bf16.msra.mxu0 %v501
        %529 = vmatpush.bf16.msra.mxu0 %v500
        %530 = vmatpush.bf16.msra.mxu0 %v499
        %531 = vmatpush.bf16.msra.mxu0 %v498
        %532 = vmatpush.bf16.msra.mxu0 %v497
        %533 = vmatmul.bf16.gmra.mxu0 %v523
        %v534 = vpop.f32.mrf.mxu0
        %v535 = vadd.f32 %v512, %v534
        %v536 = vpop.f32.mrf.mxu0
        %v537 = vadd.f32 %v517, %v536
        %538 = vdwg.mxu0
        %539 = vst [vmem:[%s239] sm:$0xff] %v535
        %540 = vst [vmem:[%s239 + $0x8] sm:$0xff] %v537
        %s541 = sand.u32 %s153, 1
        %s542 = scalar_lea.sflag [#allocation3], %s541
        %s543 = sand.u32 %s153, 1
        %s544 = smul.addr %s543, 16
        %s545 = scalar_lea.vmem [#allocation2], %s544
        // Predicated region
        $region41: #{tpu_custom_call.1} parent=39 // pred_check
          %p546 = pneg %p163
        $region42: #{tpu_custom_call.1} parent=39 // pred_check_branch
          %548 = sbr.rel (%p546) target = $region44
        $region43: #{tpu_custom_call.1} parent=39 // pred_region
          %550 = vsyncadd %s542, 0
          %s551 = smul.addr %s23, 2
          %s552 = sadd.s32 %s24, %s551
          %s553 = smul.addr %s552, 8
          %s554 = scalar_lea.hbm %s5, %s553
          %s555 = sshll.u32 %s545, 4
          %s556 = int_to_ptr.vmem [resolvable:$true] %s555
          %s557 = sshll.u32 %s554, 4
          %s558 = int_to_ptr.hbm [resolvable:$true] %s557
          %563 = dma.vmem_to_hbm [thread:$0]  %s556, 256, %s558, %s542, 128, 128, 8
        $region44: #{tpu_custom_call.1} parent=39 // pred_fallthru
          _
      $region40: #{tpu_custom_call.1} parent=5 // pred_fallthru
        _
      %p564 = scmp.le.s32.totalorder 2, %s14
      // Predicated region
      $region45: #{tpu_custom_call.1} parent=5 // pred_check
        %p565 = pneg %p564
      $region46: #{tpu_custom_call.1} parent=5 // pred_check_branch
        %567 = sbr.rel (%p565) target = $region48
      $region47: #{tpu_custom_call.1} parent=5 // pred_region
        %s568 = ssub.s32 %s14, 2
        // Predicated region
        $region49: #{tpu_custom_call.1} parent=47 // pred_check
          %p569 = pneg %p169
        $region50: #{tpu_custom_call.1} parent=47 // pred_check_branch
          %571 = sbr.rel (%p569) target = $region52
        $region51: #{tpu_custom_call.1} parent=47 // pred_region
          %s572 = sand.u32 %s154, 1
          %s573 = scalar_lea.sflag [#allocation3], %s572
          %s574 = sand.u32 %s154, 1
          %s575 = smul.addr %s574, 16
          %s576 = scalar_lea.vmem [#allocation2], %s575
          %578 = dma.done %s573, 256
        $region52: #{tpu_custom_call.1} parent=47 // pred_fallthru
          _
      $region48: #{tpu_custom_call.1} parent=5 // pred_fallthru
        _
    $region6: #{tpu_custom_call.1} parent=1 // loop_footer
      %s18 = sadd.s32 1, %s14
    $region7: #{tpu_custom_call.1} parent=1 // loop_footer_branch
      %13 = sbr.rel target = $region3
    $region8: #{tpu_custom_call.1} parent=1 // loop_exit
      _
    %579 = vsyncpa [#allocation3], 1
    %s580 = scalar_lea.sflag [#allocation3], 1
    %581 = vsyncpa %s580, 1

</llo_original>
